<compile_context>
chip_gen: v7x
topology: tpu7x:2x2x1
jax: 0.10.0
libtpu: 0.0.40
codegen_flags: <defaults>
</compile_context>

<pallas_src>
import functools

import jax
import jax.numpy as jnp
from jax.experimental import pallas as pl
from jax.experimental.pallas import tpu as pltpu


# ----------------------------------------------------------------------------
# Kernel
# ----------------------------------------------------------------------------
def _make_conv1x1_relu_kernel(nb):
    """Kernel over a (nb, C_in, T) input block and (nb, C_out, T) output block.

    nb is small (<= 8) and static, so we unroll a Python loop of 2-D matmuls:
    no (C_out, nb, T) -> (nb, C_out, T) relayout is ever materialized.
    """

    def kernel(w_ref, x_ref, o_ref):
        w = w_ref[...]                                  # (C_out, C_in), VMEM-resident
        for n in range(nb):                             # static unroll, nb <= 8
            acc = jnp.dot(w, x_ref[n], preferred_element_type=jnp.float32)
            o_ref[n] = jnp.maximum(acc, 0.0).astype(o_ref.dtype)

    return kernel


# ----------------------------------------------------------------------------
# Tiling planner
# ----------------------------------------------------------------------------
def _largest_divisor_at_most(n, cap):
    cap = max(1, min(n, cap))
    for d in range(cap, 0, -1):
        if n % d == 0:
            return d
    return 1


def _plan_tiling(N, HW, C_in, C_out, itemsize,
                 target_bytes=2 << 20,      # ~2 MiB HBM traffic per grid step
                 vmem_budget=10 << 20,      # double-buffered in+out blocks (fits v5e default)
                 max_nb=8):
    """Choose (batch block nb, lane tile) for the (N, C, H*W) layout."""
    per_elem = (C_in + C_out) * itemsize            # HBM bytes per (n, hw) element (in+out)
    want = max(target_bytes // per_elem, 128)       # elements/step we'd like
    fit = max(vmem_budget // (2 * per_elem), 128)   # elements/step that fit double-buffered
    elems = min(want, fit)

    if HW >= elems:
        # Large spatial: one batch element per step, big lane tile (multiple of 128).
        nb = 1
        tile = max((elems // 128) * 128, 128)
        tile = min(tile, HW)
    else:
        # Small spatial: full H*W per step, fold batch elements into the block.
        # TODO(synk): for HW < 128 a lane-dense N*HW packing would avoid masked
        # vst.msk stores, but it needs a transpose; launch overhead dominates here.
        tile = HW
        nb_want = max(1, elems // max(HW, 1))
        nb = _largest_divisor_at_most(N, min(nb_want, max_nb))

    # Keep >= 2 grid steps when possible so v7x's two TensorCores both get work.
    steps = -(-N // nb) * -(-HW // tile)
    if steps < 2 and tile >= 256:
        tile = max(((tile // 2) // 128) * 128, 128)

    return nb, tile


# ----------------------------------------------------------------------------
# Wrapper
# ----------------------------------------------------------------------------
@functools.partial(jax.jit, static_argnames=("target_bytes",))
def conv1x1_relu(x_nchw, weight, *, target_bytes=2 << 20):
    """1x1 conv (no bias) + ReLU, NCHW in / NCHW out.

    x_nchw: (N, C_in, H, W)
    weight: (C_out, C_in)   (Conv2d weight (C_out, C_in, 1, 1) squeezed)
    returns (N, C_out, H, W), same dtype as the input.
    """
    N, C_in, H, W = x_nchw.shape
    C_out = weight.shape[0]
    HW = H * W
    itemsize = jnp.dtype(x_nchw.dtype).itemsize

    nb, tile = _plan_tiling(N, HW, C_in, C_out, itemsize, target_bytes=target_bytes)

    # Free reshape (H, W contiguous): no transpose, no extra HBM traffic.
    x3 = x_nchw.reshape(N, C_in, HW)

    grid = (pl.cdiv(N, nb), pl.cdiv(HW, tile))   # nb divides N by construction

    out3 = pl.pallas_call(
        _make_conv1x1_relu_kernel(nb),
        out_shape=jax.ShapeDtypeStruct((N, C_out, HW), x_nchw.dtype),
        grid_spec=pltpu.PrefetchScalarGridSpec(
            num_scalar_prefetch=0,
            grid=grid,
            in_specs=[
                # Whole weight every step (constant block index -> stays resident).
                pl.BlockSpec((C_out, C_in), lambda i, j: (0, 0)),
                # nb batch elements, all channels, one big lane-dense spatial tile.
                pl.BlockSpec((nb, C_in, tile), lambda i, j: (i, 0, j)),
            ],
            out_specs=pl.BlockSpec((nb, C_out, tile), lambda i, j: (i, 0, j)),
        ),
        compiler_params=pltpu.CompilerParams(
            # No reduction axis in the grid (K = C_in is inside the kernel),
            # so both axes are parallel -> shardable across v7x's 2 TCs.
            dimension_semantics=("parallel", "parallel"),
        ),
    )(weight, x3)

    return out3.reshape(N, C_out, H, W)


# ----------------------------------------------------------------------------
# Module
# ----------------------------------------------------------------------------
class ConvertLayerPallas:
    """JAX/Pallas equivalent of the PyTorch ConvertLayer.

    list_k = [[in0, in1, ...], [out0, out1, ...]]
    Each branch i: Conv2d(in_i, out_i, kernel=1, stride=1, bias=False) + ReLU.
    """

    def __init__(self, list_k, key):
        self.weights = []
        in_chs, out_chs = list_k
        keys = jax.random.split(key, len(in_chs))
        for k, c_in, c_out in zip(keys, in_chs, out_chs):
            # Deterministic synthetic init (kaiming-uniform-ish scale).
            bound = 1.0 / (c_in ** 0.5)
            w = jax.random.uniform(
                k, (c_out, c_in), dtype=jnp.float32, minval=-bound, maxval=bound
            )
            self.weights.append(w)

    def __call__(self, list_x):
        # TODO(synk): fuse all branches into one pallas_call (scalar-prefetched
        # per-branch offsets / padded channels) to amortize per-call launch cost
        # when every branch is tiny; per-branch calls keep the code simple here.
        return [conv1x1_relu(x, w) for x, w in zip(list_x, self.weights)]


def _reference(list_x, weights):
    """Pure-JAX reference for correctness checking."""
    outs = []
    for x, w in zip(list_x, weights):
        y = jnp.einsum("nchw,oc->nohw", x, w)
        outs.append(jnp.maximum(y, 0.0))
    return outs


if __name__ == "__main__":
    key = jax.random.PRNGKey(0)
    k_param, k_x0, k_x1 = jax.random.split(key, 3)

    # Two-branch config: list_k[0] = input channels, list_k[1] = output channels
    list_k = [[4, 8], [8, 16]]
    layer = ConvertLayerPallas(list_k, k_param)

    x0 = jax.random.normal(k_x0, (2, 4, 16, 16), dtype=jnp.float32)
    x1 = jax.random.normal(k_x1, (2, 8, 8, 8), dtype=jnp.float32)
    list_x = [x0, x1]

    outs = layer(list_x)
    outs = [jax.block_until_ready(o) for o in outs]

    refs = _reference(list_x, layer.weights)
    for o, r in zip(outs, refs):
        assert o.shape == r.shape, (o.shape, r.shape)
        assert jnp.allclose(o, r, atol=1e-5, rtol=1e-5), "mismatch vs reference"

    print("KERNEL_OK")
</pallas_src>

<mosaic_0001>
module attributes {stable_mosaic.version = 11 : i64} {
  func.func @kernel(%arg0: i32, %arg1: i32, %arg2: memref<8x4xf32, #tpu.memory_space<vmem>>, %arg3: memref<2x4x128xf32, #tpu.memory_space<vmem>>, %arg4: memref<2x8x128xf32, #tpu.memory_space<vmem>>) attributes {dimension_semantics = [#tpu.dimension_semantics<parallel>, #tpu.dimension_semantics<parallel>], iteration_bounds = array<i64: 1, 2>, scalar_prefetch = 0 : i64, scratch_operands = 0 : i64, tpu.core_type = #tpu.core_type<tc>, window_params = [{pipeline_mode = #tpu.pipeline_mode<synchronous>, transform_indices = @transform_0, window_bounds = array<i64: 8, 4>}, {transform_indices = @transform_1, window_bounds = array<i64: 2, 4, 128>}, {transform_indices = @transform_2, window_bounds = array<i64: 2, 8, 128>}]} {
    %c0 = arith.constant 0 : index
    %c0_0 = arith.constant 0 : index
    %0 = vector.load %arg2[%c0, %c0_0] : memref<8x4xf32, #tpu.memory_space<vmem>>, vector<8x4xf32>
    %c0_1 = arith.constant 0 : index
    %c0_2 = arith.constant 0 : index
    %c0_3 = arith.constant 0 : index
    %1 = vector.load %arg3[%c0_1, %c0_2, %c0_3] : memref<2x4x128xf32, #tpu.memory_space<vmem>>, vector<1x4x128xf32>
    %2 = vector.shape_cast %1 : vector<1x4x128xf32> to vector<4x128xf32>
    %cst = arith.constant dense<0.000000e+00> : vector<8x128xf32>
    %3 = tpu.matmul %0, %2, %cst {dimension_numbers = #tpu.dot_dimension_numbers<[1], [0], [0], [1], [0, 0, 1, 1], [], []>} : vector<8x4xf32>, vector<4x128xf32>, vector<8x128xf32> -> vector<8x128xf32>
    %cst_4 = arith.constant 0.000000e+00 : f32
    %4 = vector.broadcast %cst_4 : f32 to vector<8x128xf32>
    %5 = arith.maximumf %3, %4 : vector<8x128xf32>
    %c0_5 = arith.constant 0 : index
    %c0_6 = arith.constant 0 : index
    %c0_7 = arith.constant 0 : index
    %6 = vector.load %arg4[%c0_5, %c0_6, %c0_7] : memref<2x8x128xf32, #tpu.memory_space<vmem>>, vector<1x8x128xf32>
    %7 = vector.shape_cast %6 : vector<1x8x128xf32> to vector<8x128xf32>
    %8 = vector.shape_cast %5 : vector<8x128xf32> to vector<1x8x128xf32>
    tpu.vector_store %arg4[%c0_5, %c0_6, %c0_7], %8 {strides = array<i32>} : memref<2x8x128xf32, #tpu.memory_space<vmem>>, vector<1x8x128xf32>,
    %c1 = arith.constant 1 : index
    %c0_8 = arith.constant 0 : index
    %c0_9 = arith.constant 0 : index
    %9 = vector.load %arg3[%c1, %c0_8, %c0_9] : memref<2x4x128xf32, #tpu.memory_space<vmem>>, vector<1x4x128xf32>
    %10 = vector.shape_cast %9 : vector<1x4x128xf32> to vector<4x128xf32>
    %cst_10 = arith.constant dense<0.000000e+00> : vector<8x128xf32>
    %11 = tpu.matmul %0, %10, %cst_10 {dimension_numbers = #tpu.dot_dimension_numbers<[1], [0], [0], [1], [0, 0, 1, 1], [], []>} : vector<8x4xf32>, vector<4x128xf32>, vector<8x128xf32> -> vector<8x128xf32>
    %cst_11 = arith.constant 0.000000e+00 : f32
    %12 = vector.broadcast %cst_11 : f32 to vector<8x128xf32>
    %13 = arith.maximumf %11, %12 : vector<8x128xf32>
    %c1_12 = arith.constant 1 : index
    %c0_13 = arith.constant 0 : index
    %c0_14 = arith.constant 0 : index
    %14 = vector.load %arg4[%c1_12, %c0_13, %c0_14] : memref<2x8x128xf32, #tpu.memory_space<vmem>>, vector<1x8x128xf32>
    %15 = vector.shape_cast %14 : vector<1x8x128xf32> to vector<8x128xf32>
    %16 = vector.shape_cast %13 : vector<8x128xf32> to vector<1x8x128xf32>
    tpu.vector_store %arg4[%c1_12, %c0_13, %c0_14], %16 {strides = array<i32>} : memref<2x8x128xf32, #tpu.memory_space<vmem>>, vector<1x8x128xf32>,
    return
  }
  func.func @transform_0(%arg0: i32, %arg1: i32) -> (i32, i32) {
    %c0_i32 = arith.constant 0 : i32
    %c0_i32_0 = arith.constant 0 : i32
    %c0_i32_1 = arith.constant 0 : i32
    return %c0_i32, %c0_i32_0 : i32, i32
  }
  func.func @transform_1(%arg0: i32, %arg1: i32) -> (i32, i32, i32) {
    %c0_i32 = arith.constant 0 : i32
    %c0_i32_0 = arith.constant 0 : i32
    return %arg0, %c0_i32, %arg1 : i32, i32, i32
  }
  func.func @transform_2(%arg0: i32, %arg1: i32) -> (i32, i32, i32) {
    %c0_i32 = arith.constant 0 : i32
    %c0_i32_0 = arith.constant 0 : i32
    return %arg0, %c0_i32, %arg1 : i32, i32, i32
  }
}

</mosaic_0001>

<llo_original>
// kernel: conv1x1_relu.1
$region0: #{conv1x1_relu.1}
  #allocation0 [shape = 'u32[]', space=smem, size = 0x4, offset = 0x4, fixed_abs, tag = 'smem constant byte address 0x4 - core index']
  #allocation1 [shape = 'u32[144,128]{1,0:T(1,128)}', space=vmem, size = 0x12000, scoped, tag = 'internal scratch']
  %s0 = inlined_call_operand.vmem [shape: f32[8,4], index: 0, kind: input, shape index: {}]
  %s1 = inlined_call_operand.vmem [shape: f32[2,4,256], index: 1, kind: input, shape index: {}]
  %s2 = inlined_call_operand.vmem [shape: f32[2,8,256], index: 2, kind: output, shape index: {}]
  %s3 = sld [smem:[#allocation0]]
  $region116: #{conv1x1_relu.1} parent=0
    _
  %s5 = ssub.s32 1, %s3
  %s6 = scalar_select 0, %s5, %s3
  $region1: #{conv1x1_relu.1} parent=0
    #allocation2 [shape = 'u8[8192]{0}', space=vmem, size = 0x2000, scoped, tag = 'input window, operand 1']
    #allocation3 [shape = 'u8[16384]{0}', space=vmem, size = 0x4000, scoped, tag = 'output window, operand 0']
    loop: start=0, step=1, limit=4
    $region2: #{conv1x1_relu.1} parent=1 // loop_pre_header
      _
    $region3: #{conv1x1_relu.1} parent=1 // loop_header
      %s8 = sphi 0, %s12
      %p9 = scmp.ge.s32.totalorder %s8, 4
      %s15 = sphi 0, %s27
      %s16 = sphi 0, %s23
      %s17 = sphi 0, %s15
      %s18 = sphi 0, %s16
      %s19 = sphi 0, %s17
      %s20 = sphi 0, %s18
      %s28 = sphi 0, %s28
      %s30 = sphi 0, %s28
      %s31 = sphi 0, %s30
      %s45 = sphi 0, %s31
      %s53 = sphi 0, %s55
      %s56 = sphi 0, %s53
      %s57 = sphi 0, %s56
      %s73 = sphi 0, %s57
      %s81 = sphi 0, %s83
      %s84 = sphi 0, %s81
      %s85 = sphi 0, %s84
      %s101 = sphi 0, %s85
    $region4: #{conv1x1_relu.1} parent=1 // loop_header_branch
      %11 = sbr.rel (%p9) target = $region8
    $region5: #{conv1x1_relu.1} parent=1 // loop_body
      %s13 = ssub.s32 %s8, 1
      %s14 = ssub.s32 %s8, 2
      %s21 = sadd.s32 1, %s16
      %p22 = scmp.ge.s32.totalorder %s21, 2
      %s23 = scalar_select %p22, 0, %s21
      %s24 = sadd.s32 1, %s15
      %s25 = scalar_select %p22, %s24, %s15
      %p26 = scmp.ge.s32.totalorder %s25, 1
      %s27 = scalar_select %p26, 0, %s25
      %s29 = sadd.s32 %s28, 1
      %p32 = scmp.eq.s32.totalorder %s8, 1
      %p33 = scmp.ne.s32.totalorder %s28, %s30
      %p34 = scmp.eq.s32.totalorder %s8, 0
      %p35 = por %p33, %p34
      %p36 = scmp.ne.s32.totalorder %s28, %s30
      %p37 = scmp.eq.s32.totalorder %s13, 1
      %p38 = por %p36, %p37
      %p39 = scmp.ne.s32.totalorder %s30, %s31
      %p40 = scmp.eq.s32.totalorder %s13, 0
      %p41 = por %p39, %p40
      %p42 = scmp.ne.s32.totalorder %s30, %s31
      %p43 = scmp.eq.s32.totalorder %s14, 1
      %p44 = por %p42, %p43
      %p46 = scmp.ne.s32.totalorder %s31, %s45
      %p47 = scmp.eq.s32.totalorder %s14, 0
      %p48 = por %p46, %p47
      %s49 = ssub.s32 %s15, %s27
      %s50 = ssub.s32 %s16, %s23
      %s51 = sor.u32 %s49, %s50
      %p52 = scmp.eq.s32.totalorder %s51, 0
      %s54 = sadd.s32 %s53, 1
      %s55 = scalar_select %p52, %s53, %s54
      %p58 = pneg %p52
      %p59 = scmp.eq.s32.totalorder %s8, 1
      %p60 = por %p58, %p59
      %p61 = scmp.ne.s32.totalorder %s53, %s56
      %p62 = scmp.eq.s32.totalorder %s8, 0
      %p63 = por %p61, %p62
      %p64 = scmp.ne.s32.totalorder %s53, %s56
      %p65 = scmp.eq.s32.totalorder %s13, 1
      %p66 = por %p64, %p65
      %p67 = scmp.ne.s32.totalorder %s56, %s57
      %p68 = scmp.eq.s32.totalorder %s13, 0
      %p69 = por %p67, %p68
      %p70 = scmp.ne.s32.totalorder %s56, %s57
      %p71 = scmp.eq.s32.totalorder %s14, 1
      %p72 = por %p70, %p71
      %p74 = scmp.ne.s32.totalorder %s57, %s73
      %p75 = scmp.eq.s32.totalorder %s14, 0
      %p76 = por %p74, %p75
      %s77 = ssub.s32 %s15, %s27
      %s78 = ssub.s32 %s16, %s23
      %s79 = sor.u32 %s77, %s78
      %p80 = scmp.eq.s32.totalorder %s79, 0
      %s82 = sadd.s32 %s81, 1
      %s83 = scalar_select %p80, %s81, %s82
      %p86 = pneg %p80
      %p87 = scmp.eq.s32.totalorder %s8, 1
      %p88 = por %p86, %p87
      %p89 = scmp.ne.s32.totalorder %s81, %s84
      %p90 = scmp.eq.s32.totalorder %s8, 0
      %p91 = por %p89, %p90
      %p92 = scmp.ne.s32.totalorder %s81, %s84
      %p93 = scmp.eq.s32.totalorder %s13, 1
      %p94 = por %p92, %p93
      %p95 = scmp.ne.s32.totalorder %s84, %s85
      %p96 = scmp.eq.s32.totalorder %s13, 0
      %p97 = por %p95, %p96
      %p98 = scmp.ne.s32.totalorder %s84, %s85
      %p99 = scmp.eq.s32.totalorder %s14, 1
      %p100 = por %p98, %p99
      %p102 = scmp.ne.s32.totalorder %s85, %s101
      %p103 = scmp.eq.s32.totalorder %s14, 0
      %p104 = por %p102, %p103
      %p105 = scmp.le.s32.totalorder 1, %s8
      %p106 = scmp.lt.s32.totalorder %s8, 3
      %p107 = pnand %p105, %p106
      %p108 = pneg %p107
      // Predicated region
      $region9: #{conv1x1_relu.1} parent=5 // pred_check
        _
      $region10: #{conv1x1_relu.1} parent=5 // pred_check_branch
        %110 = sbr.rel (%p107) target = $region12
      $region11: #{conv1x1_relu.1} parent=5 // pred_region
        %s111 = ssub.s32 %s8, 1
        // Predicated region
        $region13: #{conv1x1_relu.1} parent=11 // pred_check
          %p112 = pneg %p41
        $region14: #{conv1x1_relu.1} parent=11 // pred_check_branch
          %114 = sbr.rel (%p112) target = $region16
        $region15: #{conv1x1_relu.1} parent=11 // pred_region
          _
        $region16: #{conv1x1_relu.1} parent=11 // pred_fallthru
          _
      $region12: #{conv1x1_relu.1} parent=5 // pred_fallthru
        _
      %p115 = scmp.lt.s32.totalorder %s8, 2
      // Predicated region
      $region17: #{conv1x1_relu.1} parent=5 // pred_check
        %p116 = pneg %p115
      $region18: #{conv1x1_relu.1} parent=5 // pred_check_branch
        %118 = sbr.rel (%p116) target = $region20
      $region19: #{conv1x1_relu.1} parent=5 // pred_region
        // Predicated region
        $region21: #{conv1x1_relu.1} parent=19 // pred_check
          %p119 = pneg %p63
        $region22: #{conv1x1_relu.1} parent=19 // pred_check_branch
          %121 = sbr.rel (%p119) target = $region24
        $region23: #{conv1x1_relu.1} parent=19 // pred_region
          %s122 = sand.u32 %s53, 1
          %s123 = sand.u32 %s53, 1
          %s124 = smul.addr %s123, 8
          %s125 = scalar_lea.vmem [#allocation2], %s124
          %s126 = smul.u32 2, %s15
          %s127 = smul.addr %s126, 2
          %s128 = sadd.s32 %s16, %s127
          %s129 = smul.addr %s128, 4
          %s130 = scalar_lea.vmem %s1, %s129
          // Predicated region
          $region25: #{conv1x1_relu.1} parent=23 // pred_check
            _
          $region26: #{conv1x1_relu.1} parent=23 // pred_check_branch
            %132 = sbr.rel (0) target = $region28
          $region27: #{conv1x1_relu.1} parent=23 // pred_region
            // Predicated region
            $region29: #{conv1x1_relu.1} parent=27 // pred_check
              _
            $region30: #{conv1x1_relu.1} parent=27 // pred_check_branch
              %134 = sbr.rel target = $region32
            $region31: #{conv1x1_relu.1} parent=27 // pred_region
              // Predicated region
              $region44: #{conv1x1_relu.1} parent=31 // pred_check
                _
              $region45: #{conv1x1_relu.1} parent=31 // pred_check_branch
                %151 = sbr.rel (0) target = $region47
              $region46: #{conv1x1_relu.1} parent=31 // pred_region
                loop: start=0, step=1, limit=1
                $region48: #{conv1x1_relu.1} parent=46 // loop_pre_header
                  _
                $region49: #{conv1x1_relu.1} parent=46 // loop_header
                  %s153 = sphi 0, %s157
                  %p154 = scmp.ge.s32.totalorder %s153, 1
                  %s158 = sphi %s130, %s130
                  %s159 = sphi %s125, %s125
                $region50: #{conv1x1_relu.1} parent=46 // loop_header_branch
                  %156 = sbr.rel (%p154) target = $region54
                $region51: #{conv1x1_relu.1} parent=46 // loop_body
                  _
                $region52: #{conv1x1_relu.1} parent=46 // loop_footer
                  %s157 = sadd.s32 1, %s153
                $region53: #{conv1x1_relu.1} parent=46 // loop_footer_branch
                  %152 = sbr.rel target = $region49
                $region54: #{conv1x1_relu.1} parent=46 // loop_exit
                  _
                loop: start=0, step=1, limit=1
                $region55: #{conv1x1_relu.1} parent=46 // loop_pre_header
                  _
                $region56: #{conv1x1_relu.1} parent=46 // loop_header
                  %s162 = sphi 0, %s166
                  %p163 = scmp.ge.s32.totalorder %s162, 1
                  %s167 = sphi %s130, %s130
                  %s168 = sphi %s125, %s125
                $region57: #{conv1x1_relu.1} parent=46 // loop_header_branch
                  %165 = sbr.rel (%p163) target = $region61
                $region58: #{conv1x1_relu.1} parent=46 // loop_body
                  %v169 = vld [vmem:[%s167] sm:$0xf]
                  %170 = vst [vmem:[%s168] sm:$0xf] %v169
                  %v171 = vld [vmem:[%s167 + $0x8] sm:$0xf]
                  %172 = vst [vmem:[%s168 + $0x4] sm:$0xf] %v171
                $region59: #{conv1x1_relu.1} parent=46 // loop_footer
                  %s166 = sadd.s32 1, %s162
                $region60: #{conv1x1_relu.1} parent=46 // loop_footer_branch
                  %161 = sbr.rel target = $region56
                $region61: #{conv1x1_relu.1} parent=46 // loop_exit
                  _
              $region47: #{conv1x1_relu.1} parent=31 // pred_fallthru
                _
            $region32: #{conv1x1_relu.1} parent=27 // pred_fallthru
              _
            // Predicated region
            $region33: #{conv1x1_relu.1} parent=27 // pred_check
              _
            $region34: #{conv1x1_relu.1} parent=27 // pred_check_branch
              %136 = sbr.rel (0) target = $region36
            $region35: #{conv1x1_relu.1} parent=27 // pred_region
              loop: start=0, step=1, limit=1
              $region37: #{conv1x1_relu.1} parent=35 // loop_pre_header
                _
              $region38: #{conv1x1_relu.1} parent=35 // loop_header
                %s139 = sphi 0, %s143
                %p140 = scmp.ge.s32.totalorder %s139, 1
                %s144 = sphi %s130, %s130
                %s145 = sphi %s125, %s125
              $region39: #{conv1x1_relu.1} parent=35 // loop_header_branch
                %142 = sbr.rel (%p140) target = $region43
              $region40: #{conv1x1_relu.1} parent=35 // loop_body
                %v146 = vld [vmem:[%s144] sm:$0xf]
                %147 = vst [vmem:[%s145] sm:$0xf] %v146
                %v148 = vld [vmem:[%s144 + $0x8] sm:$0xf]
                %149 = vst [vmem:[%s145 + $0x4] sm:$0xf] %v148
              $region41: #{conv1x1_relu.1} parent=35 // loop_footer
                %s143 = sadd.s32 1, %s139
              $region42: #{conv1x1_relu.1} parent=35 // loop_footer_branch
                %138 = sbr.rel target = $region38
              $region43: #{conv1x1_relu.1} parent=35 // loop_exit
                _
            $region36: #{conv1x1_relu.1} parent=27 // pred_fallthru
              _
          $region28: #{conv1x1_relu.1} parent=23 // pred_fallthru
            _
          %173 = vnop
        $region24: #{conv1x1_relu.1} parent=19 // pred_fallthru
          _
      $region20: #{conv1x1_relu.1} parent=5 // pred_fallthru
        _
      %p174 = scmp.le.s32.totalorder 1, %s8
      %p175 = scmp.lt.s32.totalorder %s8, 3
      %p176 = pnand %p174, %p175
      %p177 = pneg %p176
      // Predicated region
      $region62: #{conv1x1_relu.1} parent=5 // pred_check
        _
      $region63: #{conv1x1_relu.1} parent=5 // pred_check_branch
        %179 = sbr.rel (%p176) target = $region65
      $region64: #{conv1x1_relu.1} parent=5 // pred_region
        %s180 = ssub.s32 %s8, 1
        %s181 = sand.u32 %s56, 1
        %s182 = sand.u32 %s56, 1
        %s183 = smul.addr %s182, 8
        %s184 = scalar_lea.vmem [#allocation2], %s183
        // Predicated region
        $region66: #{conv1x1_relu.1} parent=64 // pred_check
          %p185 = pneg %p69
        $region67: #{conv1x1_relu.1} parent=64 // pred_check_branch
          %187 = sbr.rel (%p185) target = $region69
        $region68: #{conv1x1_relu.1} parent=64 // pred_region
          _
        $region69: #{conv1x1_relu.1} parent=64 // pred_fallthru
          _
        %p188 = pneg %p41
        %p189 = pneg %p38
        %s190 = sand.u32 %s56, 1
        %s191 = sand.u32 %s56, 1
        %s192 = smul.addr %s191, 8
        %s193 = scalar_lea.vmem [#allocation2], %s192
        %p194 = pneg %p69
        %p195 = pneg %p66
        %p196 = pneg %p97
        %p197 = pneg %p94
        %s198 = sand.u32 %s84, 1
        %s199 = sand.u32 %s84, 1
        %s200 = smul.addr %s199, 16
        %s201 = scalar_lea.vmem [#allocation3], %s200
        %s202 = smul.u32 2, %s17
        %s203 = smul.u32 2, %s17
        %v204 = vld [vmem:[%s0] sm:$0xff]
        %v205 = vld [vmem:[%s184] sm:$0xf]
        %vm206 = vcmask 31744
        %v208 = vsel %vm206, %v204, 0
        %vm210 = vcmask 1043456
        %v212 = vsel %vm210, %v205, 0
        %214 = vmatprep.subr.mxu0 0.0
        %215 = vmatpush1.msra.mxu0 %v212
        %216 = vmatprep.subr.mxu0 0.0
        %217 = vmatpush1.msra.mxu0 0.0
        %218 = vmatprep.subr.mxu0 0.0
        %219 = vmatpush1.msra.mxu0 0.0
        %220 = vmatprep.subr.mxu0 0.0
        %221 = vmatpush1.msra.mxu0 0.0
        %222 = vmatprep.subr.mxu0 0.0
        %223 = vmatpush1.msra.mxu0 0.0
        %224 = vmatprep.subr.mxu0 0.0
        %225 = vmatpush1.msra.mxu0 0.0
        %226 = vmatprep.subr.mxu0 0.0
        %227 = vmatpush1.msra.mxu0 0.0
        %228 = vmatprep.subr.mxu0 0.0
        %229 = vmatpush1.msra.mxu0 0.0
        %230 = vmatprep.subr.mxu0 0.0
        %231 = vmatpush1.msra.mxu0 0.0
        %232 = vmatprep.subr.mxu0 0.0
        %233 = vmatpush1.msra.mxu0 0.0
        %234 = vmatprep.subr.mxu0 0.0
        %235 = vmatpush1.msra.mxu0 0.0
        %236 = vmatprep.subr.mxu0 0.0
        %237 = vmatpush1.msra.mxu0 0.0
        %238 = vmatprep.subr.mxu0 0.0
        %239 = vmatpush1.msra.mxu0 0.0
        %240 = vmatprep.subr.mxu0 0.0
        %241 = vmatpush1.msra.mxu0 0.0
        %242 = vmatprep.subr.mxu0 0.0
        %243 = vmatpush1.msra.mxu0 0.0
        %244 = vmatprep.subr.mxu0 0.0
        %245 = vmatpush1.msra.mxu0 0.0
        %246 = vmatprep.subr.mxu0 0.0
        %247 = vmatpush1.msra.mxu0 0.0
        %248 = vmatprep.subr.mxu0 0.0
        %249 = vmatpush1.msra.mxu0 0.0
        %250 = vmatprep.subr.mxu0 0.0
        %251 = vmatpush1.msra.mxu0 0.0
        %252 = vmatprep.subr.mxu0 0.0
        %253 = vmatpush1.msra.mxu0 0.0
        %254 = vmatprep.subr.mxu0 0.0
        %255 = vmatpush1.msra.mxu0 0.0
        %256 = vmatprep.subr.mxu0 0.0
        %257 = vmatpush1.msra.mxu0 0.0
        %258 = vmatprep.subr.mxu0 0.0
        %259 = vmatpush1.msra.mxu0 0.0
        %260 = vmatprep.subr.mxu0 0.0
        %261 = vmatpush1.msra.mxu0 0.0
        %262 = vmatprep.subr.mxu0 0.0
        %263 = vmatpush1.msra.mxu0 0.0
        %264 = vmatprep.subr.mxu0 0.0
        %265 = vmatpush1.msra.mxu0 0.0
        %266 = vmatprep.subr.mxu0 0.0
        %267 = vmatpush1.msra.mxu0 0.0
        %268 = vmatprep.subr.mxu0 0.0
        %269 = vmatpush1.msra.mxu0 0.0
        %270 = vmatprep.subr.mxu0 0.0
        %271 = vmatpush1.msra.mxu0 0.0
        %272 = vmatprep.subr.mxu0 0.0
        %273 = vmatpush1.msra.mxu0 0.0
        %274 = vmatprep.subr.mxu0 0.0
        %275 = vmatpush1.msra.mxu0 0.0
        %276 = vmatprep.subr.mxu0 0.0
        %277 = vmatpush1.msra.mxu0 0.0
        %278 = vmatprep.mubr.f32.mxu0 0.0
        %279 = vmatmul.mubr.f32.gmra.mrb[0].mxu0 %v208
        %v280 = vpop.f32.mrb[0].mxu0
        %v281 = vadd.f32 0.0, %v280
        %v282 = vpop.f32.mrb[0].mxu0
        %283 = vdwg.mxu0
        %v284 = vmax.f32 %v281, 0.0
        %285 = vst [vmem:[%s201] sm:$0xff] %v284
        %s286 = scalar_lea.vmem %s184, 4 [#allocation2]
        %v287 = vld [vmem:[%s286] sm:$0xf]
        %v289 = vsel %vm210, %v287, 0
        %291 = vmatprep.subr.mxu0 0.0
        %292 = vmatpush1.msra.mxu0 %v289
        %293 = vmatprep.subr.mxu0 0.0
        %294 = vmatpush1.msra.mxu0 0.0
        %295 = vmatprep.subr.mxu0 0.0
        %296 = vmatpush1.msra.mxu0 0.0
        %297 = vmatprep.subr.mxu0 0.0
        %298 = vmatpush1.msra.mxu0 0.0
        %299 = vmatprep.subr.mxu0 0.0
        %300 = vmatpush1.msra.mxu0 0.0
        %301 = vmatprep.subr.mxu0 0.0
        %302 = vmatpush1.msra.mxu0 0.0
        %303 = vmatprep.subr.mxu0 0.0
        %304 = vmatpush1.msra.mxu0 0.0
        %305 = vmatprep.subr.mxu0 0.0
        %306 = vmatpush1.msra.mxu0 0.0
        %307 = vmatprep.subr.mxu0 0.0
        %308 = vmatpush1.msra.mxu0 0.0
        %309 = vmatprep.subr.mxu0 0.0
        %310 = vmatpush1.msra.mxu0 0.0
        %311 = vmatprep.subr.mxu0 0.0
        %312 = vmatpush1.msra.mxu0 0.0
        %313 = vmatprep.subr.mxu0 0.0
        %314 = vmatpush1.msra.mxu0 0.0
        %315 = vmatprep.subr.mxu0 0.0
        %316 = vmatpush1.msra.mxu0 0.0
        %317 = vmatprep.subr.mxu0 0.0
        %318 = vmatpush1.msra.mxu0 0.0
        %319 = vmatprep.subr.mxu0 0.0
        %320 = vmatpush1.msra.mxu0 0.0
        %321 = vmatprep.subr.mxu0 0.0
        %322 = vmatpush1.msra.mxu0 0.0
        %323 = vmatprep.subr.mxu0 0.0
        %324 = vmatpush1.msra.mxu0 0.0
        %325 = vmatprep.subr.mxu0 0.0
        %326 = vmatpush1.msra.mxu0 0.0
        %327 = vmatprep.subr.mxu0 0.0
        %328 = vmatpush1.msra.mxu0 0.0
        %329 = vmatprep.subr.mxu0 0.0
        %330 = vmatpush1.msra.mxu0 0.0
        %331 = vmatprep.subr.mxu0 0.0
        %332 = vmatpush1.msra.mxu0 0.0
        %333 = vmatprep.subr.mxu0 0.0
        %334 = vmatpush1.msra.mxu0 0.0
        %335 = vmatprep.subr.mxu0 0.0
        %336 = vmatpush1.msra.mxu0 0.0
        %337 = vmatprep.subr.mxu0 0.0
        %338 = vmatpush1.msra.mxu0 0.0
        %339 = vmatprep.subr.mxu0 0.0
        %340 = vmatpush1.msra.mxu0 0.0
        %341 = vmatprep.subr.mxu0 0.0
        %342 = vmatpush1.msra.mxu0 0.0
        %343 = vmatprep.subr.mxu0 0.0
        %344 = vmatpush1.msra.mxu0 0.0
        %345 = vmatprep.subr.mxu0 0.0
        %346 = vmatpush1.msra.mxu0 0.0
        %347 = vmatprep.subr.mxu0 0.0
        %348 = vmatpush1.msra.mxu0 0.0
        %349 = vmatprep.subr.mxu0 0.0
        %350 = vmatpush1.msra.mxu0 0.0
        %351 = vmatprep.subr.mxu0 0.0
        %352 = vmatpush1.msra.mxu0 0.0
        %353 = vmatprep.subr.mxu0 0.0
        %354 = vmatpush1.msra.mxu0 0.0
        %355 = vmatprep.mubr.f32.mxu0 0.0
        %356 = vmatmul.mubr.f32.gmra.mrb[0].mxu0 %v208
        %v357 = vpop.f32.mrb[0].mxu0
        %v358 = vadd.f32 0.0, %v357
        %v359 = vpop.f32.mrb[0].mxu0
        %360 = vdwg.mxu0
        %v361 = vmax.f32 %v358, 0.0
        %s362 = scalar_lea.vmem %s201, 8 [#allocation3]
        %363 = vst [vmem:[%s362] sm:$0xff] %v361
        %s364 = sand.u32 %s84, 1
        %s365 = sand.u32 %s84, 1
        %s366 = smul.addr %s365, 16
        %s367 = scalar_lea.vmem [#allocation3], %s366
        // Predicated region
        $region70: #{conv1x1_relu.1} parent=64 // pred_check
          %p368 = pneg %p94
        $region71: #{conv1x1_relu.1} parent=64 // pred_check_branch
          %370 = sbr.rel (%p368) target = $region73
        $region72: #{conv1x1_relu.1} parent=64 // pred_region
          %s371 = smul.u32 2, %s17
          %s372 = smul.addr %s371, 2
          %s373 = sadd.s32 %s18, %s372
          %s374 = smul.addr %s373, 8
          %s375 = scalar_lea.vmem %s2, %s374
          // Predicated region
          $region74: #{conv1x1_relu.1} parent=72 // pred_check
            _
          $region75: #{conv1x1_relu.1} parent=72 // pred_check_branch
            %377 = sbr.rel (0) target = $region77
          $region76: #{conv1x1_relu.1} parent=72 // pred_region
            // Predicated region
            $region78: #{conv1x1_relu.1} parent=76 // pred_check
              _
            $region79: #{conv1x1_relu.1} parent=76 // pred_check_branch
              %379 = sbr.rel (0) target = $region81
            $region80: #{conv1x1_relu.1} parent=76 // pred_region
              // Predicated region
              $region93: #{conv1x1_relu.1} parent=80 // pred_check
                _
              $region94: #{conv1x1_relu.1} parent=80 // pred_check_branch
                %396 = sbr.rel (0) target = $region96
              $region95: #{conv1x1_relu.1} parent=80 // pred_region
                loop: start=0, step=1, limit=1
                $region97: #{conv1x1_relu.1} parent=95 // loop_pre_header
                  _
                $region98: #{conv1x1_relu.1} parent=95 // loop_header
                  %s398 = sphi 0, %s402
                  %p399 = scmp.ge.s32.totalorder %s398, 1
                  %s403 = sphi %s367, %s367
                  %s404 = sphi %s375, %s375
                $region99: #{conv1x1_relu.1} parent=95 // loop_header_branch
                  %401 = sbr.rel (%p399) target = $region103
                $region100: #{conv1x1_relu.1} parent=95 // loop_body
                  %v405 = vld [vmem:[%s403] sm:$0xff]
                  %406 = vst [vmem:[%s404] sm:$0xff] %v405
                  %v407 = vld [vmem:[%s403 + $0x8] sm:$0xff]
                  %408 = vst [vmem:[%s404 + $0x10] sm:$0xff] %v407
                $region101: #{conv1x1_relu.1} parent=95 // loop_footer
                  %s402 = sadd.s32 1, %s398
                $region102: #{conv1x1_relu.1} parent=95 // loop_footer_branch
                  %397 = sbr.rel target = $region98
                $region103: #{conv1x1_relu.1} parent=95 // loop_exit
                  _
              $region96: #{conv1x1_relu.1} parent=80 // pred_fallthru
                _
              // Predicated region
              $region104: #{conv1x1_relu.1} parent=80 // pred_check
                _
              $region105: #{conv1x1_relu.1} parent=80 // pred_check_branch
                %410 = sbr.rel target = $region107
              $region106: #{conv1x1_relu.1} parent=80 // pred_region
                _
              $region107: #{conv1x1_relu.1} parent=80 // pred_fallthru
                _
            $region81: #{conv1x1_relu.1} parent=76 // pred_fallthru
              _
            // Predicated region
            $region82: #{conv1x1_relu.1} parent=76 // pred_check
              _
            $region83: #{conv1x1_relu.1} parent=76 // pred_check_branch
              %381 = sbr.rel target = $region85
            $region84: #{conv1x1_relu.1} parent=76 // pred_region
              loop: start=0, step=1, limit=1
              $region86: #{conv1x1_relu.1} parent=84 // loop_pre_header
                _
              $region87: #{conv1x1_relu.1} parent=84 // loop_header
                %s384 = sphi 0, %s388
                %p385 = scmp.ge.s32.totalorder %s384, 1
                %s389 = sphi %s367, %s367
                %s390 = sphi %s375, %s375
              $region88: #{conv1x1_relu.1} parent=84 // loop_header_branch
                %387 = sbr.rel (%p385) target = $region92
              $region89: #{conv1x1_relu.1} parent=84 // loop_body
                %v391 = vld [vmem:[%s389] sm:$0xff]
                %392 = vst [vmem:[%s390] sm:$0xff] %v391
                %v393 = vld [vmem:[%s389 + $0x8] sm:$0xff]
                %394 = vst [vmem:[%s390 + $0x10] sm:$0xff] %v393
              $region90: #{conv1x1_relu.1} parent=84 // loop_footer
                %s388 = sadd.s32 1, %s384
              $region91: #{conv1x1_relu.1} parent=84 // loop_footer_branch
                %383 = sbr.rel target = $region87
              $region92: #{conv1x1_relu.1} parent=84 // loop_exit
                _
            $region85: #{conv1x1_relu.1} parent=76 // pred_fallthru
              _
          $region77: #{conv1x1_relu.1} parent=72 // pred_fallthru
            _
          %411 = vnop
        $region73: #{conv1x1_relu.1} parent=64 // pred_fallthru
          _
      $region65: #{conv1x1_relu.1} parent=5 // pred_fallthru
        _
      %p412 = scmp.le.s32.totalorder 2, %s8
      // Predicated region
      $region108: #{conv1x1_relu.1} parent=5 // pred_check
        %p413 = pneg %p412
      $region109: #{conv1x1_relu.1} parent=5 // pred_check_branch
        %415 = sbr.rel (%p413) target = $region111
      $region110: #{conv1x1_relu.1} parent=5 // pred_region
        %s416 = ssub.s32 %s8, 2
        // Predicated region
        $region112: #{conv1x1_relu.1} parent=110 // pred_check
          %p417 = pneg %p100
        $region113: #{conv1x1_relu.1} parent=110 // pred_check_branch
          %419 = sbr.rel (%p417) target = $region115
        $region114: #{conv1x1_relu.1} parent=110 // pred_region
          %s420 = sand.u32 %s85, 1
          %s421 = sand.u32 %s85, 1
          %s422 = smul.addr %s421, 16
          %s423 = scalar_lea.vmem [#allocation3], %s422
        $region115: #{conv1x1_relu.1} parent=110 // pred_fallthru
          _
      $region111: #{conv1x1_relu.1} parent=5 // pred_fallthru
        _
    $region6: #{conv1x1_relu.1} parent=1 // loop_footer
      %s12 = sadd.s32 1, %s8
    $region7: #{conv1x1_relu.1} parent=1 // loop_footer_branch
      %7 = sbr.rel target = $region3
    $region8: #{conv1x1_relu.1} parent=1 // loop_exit
      _

</llo_original>
